<compile_context>
chip_gen: v6e
topology: v6e:2x2x1
jax: 0.10.0
libtpu: 0.0.40
codegen_flags: <defaults>
</compile_context>

<pallas_src>
import functools

import jax
import jax.numpy as jnp
from jax.experimental import pallas as pl
from jax.experimental.pallas import tpu as pltpu


class WordMap:
    """Minimal stand-in for the undefined WordMap in the reference code."""

    def __init__(self, vocab):
        self._m = {w: i for i, w in enumerate(vocab)}

    def __contains__(self, w):
        return w in self._m

    def __getitem__(self, w):
        return self._m[w]


# -----------------------------------------------------------------------------
# Pallas kernels
# -----------------------------------------------------------------------------

_LANE = 128            # lane width: keep embedding dim lane-dense
_FALLBACK_TILE = 8     # rows gathered per grid step on the HBM-fallback path


def _round_up(x, m):
    return (x + m - 1) // m * m


def _pick_tile(s):
    """Token-tile ladder: avoid padding short sequences all the way to 128."""
    s8 = _round_up(max(int(s), 1), 8)
    for t in (8, 16, 32, 64, 128):
        if s8 <= t:
            return t
    return 128


@functools.lru_cache(maxsize=1)
def _vmem_capacity_bytes():
    try:
        return int(pltpu.get_tpu_info().vmem_capacity_bytes)
    except Exception:
        return 64 * 1024 * 1024   # conservative: v7x per-TensorCore VMEM


# ---- Fast path: whole table resident in VMEM (single buffer), row-copy gather


def _vmem_gather_kernel(idx_ref, tbl_ref, o_ref):
    # idx_ref: (Sp,)      int32  -- token indices, scalar-prefetched into SMEM
    # tbl_ref: (V1, Ep)   f32    -- whole embedding table, single VMEM buffer
    # o_ref:   (tile, Ep) f32    -- dense output tile
    tile = o_ref.shape[0]
    base = pl.program_id(0) * tile
    # Static unroll: destination rows are static, only the table row index is
    # dynamic; the independent copies give the scheduler room to pipeline them.
    for r in range(tile):
        row = idx_ref[base + r]
        o_ref[pl.ds(r, 1), :] = tbl_ref[pl.ds(row, 1), :]


# ---- Fallback: table stays in HBM, overlapped per-row DMA gather (8 rows/step)


def _hbm_gather_kernel(idx_ref, tbl_hbm, o_ref, buf, sems):
    # idx_ref: (Sp,) int32 in SMEM; tbl_hbm: (V1, Ep) raw HBM ref
    # o_ref/buf: (tile, Ep); sems: DMA semaphores, one per row in flight
    tile = o_ref.shape[0]
    base = pl.program_id(0) * tile
    copies = []
    for r in range(tile):                       # issue all row DMAs, then wait:
        row = idx_ref[base + r]                 # fetch latencies overlap
        cp = pltpu.make_async_copy(
            tbl_hbm.at[pl.ds(row, 1), :],
            buf.at[pl.ds(r, 1), :],
            sems.at[r],
        )
        cp.start()
        copies.append(cp)
    for cp in copies:
        cp.wait()
    o_ref[...] = buf[...]                       # dense (tile, Ep) store


# -----------------------------------------------------------------------------
# Host wrappers
# -----------------------------------------------------------------------------


@functools.partial(
    jax.jit, static_argnames=("tile_s", "resident", "vmem_limit_bytes"))
def _padded_lookup(tbl, idx_p, *, tile_s, resident, vmem_limit_bytes):
    """Gather rows of the (lane-padded) table at padded indices -> (Sp, Ep)."""
    V1, Ep = tbl.shape
    Sp = idx_p.shape[0]
    cparams = pltpu.CompilerParams(
        dimension_semantics=("parallel",),
        vmem_limit_bytes=int(vmem_limit_bytes),
    )

    if resident:
        grid_spec = pltpu.PrefetchScalarGridSpec(
            num_scalar_prefetch=1,
            grid=(Sp // tile_s,),
            # Whole-array VMEM placement: one buffer, no pointless double-buffer
            # for a constant-index table.
            in_specs=[pl.BlockSpec(memory_space=pltpu.MemorySpace.VMEM)],
            out_specs=pl.BlockSpec((tile_s, Ep), lambda i, idx: (i, 0)),
        )
        return pl.pallas_call(
            _vmem_gather_kernel,
            out_shape=jax.ShapeDtypeStruct((Sp, Ep), tbl.dtype),
            grid_spec=grid_spec,
            compiler_params=cparams,
        )(idx_p, tbl)

    tile = _FALLBACK_TILE
    grid_spec = pltpu.PrefetchScalarGridSpec(
        num_scalar_prefetch=1,
        grid=(Sp // tile,),
        in_specs=[pl.BlockSpec(memory_space=pl.ANY)],   # table stays in HBM
        out_specs=pl.BlockSpec((tile, Ep), lambda i, idx: (i, 0)),
        scratch_shapes=[
            pltpu.VMEM((tile, Ep), tbl.dtype),
            pltpu.SemaphoreType.DMA((tile,)),
        ],
    )
    return pl.pallas_call(
        _hbm_gather_kernel,
        out_shape=jax.ShapeDtypeStruct((Sp, Ep), tbl.dtype),
        grid_spec=grid_spec,
        compiler_params=cparams,
    )(idx_p, tbl)


def embedding_lookup_pallas(emb_table, indices, *, out_features=None):
    """Gather rows of emb_table[(V+1, E)] at indices[(S,)] -> (S, out_features)."""
    V1, Ein = emb_table.shape
    E = int(out_features) if out_features is not None else int(Ein)
    S = int(indices.shape[0])
    dt = emb_table.dtype
    itemsize = jnp.dtype(dt).itemsize

    Ep = _round_up(Ein, _LANE)         # lane-dense rows -> unmasked stores
    if Ep != Ein:                       # hoisted/cached in LearnEmbeddingPallas;
        emb_table = jnp.zeros((V1, Ep), dt).at[:, :Ein].set(emb_table)

    tile_s = _pick_tile(S)
    Sp = _round_up(max(S, 1), tile_s)   # padding index 0 -> zero row
    idx_p = jnp.zeros((Sp,), jnp.int32).at[:S].set(indices.astype(jnp.int32))

    # Generation-aware VMEM budgeting (v7x: 64 MiB, v5e/v6e: 128 MiB).
    cap = _vmem_capacity_bytes()
    budget = int(0.75 * cap)
    tbl_bytes = V1 * Ep * itemsize                         # single-buffered table
    need_resident = tbl_bytes + 2 * tile_s * Ep * itemsize + (1 << 20)
    resident = need_resident <= budget
    if resident:
        need = need_resident
    else:
        need = (2 + 1) * _FALLBACK_TILE * Ep * itemsize + (1 << 20)
    vmem_limit = int(min(max(need + (4 << 20), 32 << 20), int(0.8 * cap)))

    out = _padded_lookup(emb_table, idx_p, tile_s=tile_s,
                         resident=bool(resident),
                         vmem_limit_bytes=vmem_limit)
    return out[:S, :E]


# -----------------------------------------------------------------------------
# Module wrapper
# -----------------------------------------------------------------------------


class LearnEmbeddingPallas:
    """JAX/Pallas port of the PyTorch LearnEmbedding module."""

    def __init__(self, vocab, emb_size, key):
        self.wm = WordMap(vocab)
        self.emb_size = int(emb_size)
        n_rows = len(vocab) + 1
        # f32 to match nn.Embedding exactly: N(0,1) init, padding row 0 zeroed.
        table = jax.random.normal(key, (n_rows, emb_size), dtype=jnp.float32)
        self.emb_table = table.at[0].set(0.0)
        # Cache the lane-dense copy once so forward never re-pads O(V*E) data.
        ep = _round_up(self.emb_size, _LANE)
        if ep == self.emb_size:
            self._tbl_padded = self.emb_table
        else:
            self._tbl_padded = (jnp.zeros((n_rows, ep), jnp.float32)
                                .at[:, :self.emb_size].set(self.emb_table))

    def forward(self, x, f, g):
        # TODO(synk): host-side word->index mapping (Python string logic, no
        # Pallas equivalent); only the embedding gather runs on TPU.
        im = [self.wm[q] + 1 if q in self.wm else 0 for q in f[x]]
        idx = jnp.asarray(im, dtype=jnp.int32)
        return embedding_lookup_pallas(self._tbl_padded, idx,
                                       out_features=self.emb_size)


if __name__ == "__main__":
    key = jax.random.PRNGKey(0)

    # Small synthetic setup: vocab of 10 words, emb_size=128.
    vocab = [f"w{i}" for i in range(10)]
    emb_size = 128
    model = LearnEmbeddingPallas(vocab, emb_size, key)

    # --- short sequence (8 tokens, incl. OOV): tile_s=8, single grid step ---
    f = {"sample": ["w0", "w3", "zzz", "w7", "w1", "w9", "zzz", "w4"]}
    x = "sample"
    g = None  # unused by forward, as in the reference module

    out = jax.block_until_ready(model.forward(x, f, g))

    im_ref = jnp.asarray(
        [model.wm[q] + 1 if q in model.wm else 0 for q in f[x]], dtype=jnp.int32)
    ref = model.emb_table[im_ref]
    assert out.shape == (len(f[x]), emb_size), out.shape
    assert out.dtype == jnp.float32
    assert bool(jnp.allclose(out, ref, atol=0.0, rtol=0.0)), "mismatch (short seq)"
    # padding (OOV -> index 0) rows must be zero
    assert bool(jnp.all(out[2] == 0.0)) and bool(jnp.all(out[6] == 0.0))

    # --- longer sequence (300 tokens): tile_s=128, multi-step "parallel" grid ---
    toks = [("zzz" if i % 7 == 0 else f"w{i % 10}") for i in range(300)]
    f2 = {"long": toks}
    out2 = jax.block_until_ready(model.forward("long", f2, g))
    im2 = jnp.asarray(
        [model.wm[q] + 1 if q in model.wm else 0 for q in toks], dtype=jnp.int32)
    ref2 = model.emb_table[im2]
    assert out2.shape == (300, emb_size), out2.shape
    assert bool(jnp.allclose(out2, ref2, atol=0.0, rtol=0.0)), "mismatch (long seq)"

    print("KERNEL_OK")
</pallas_src>

<mosaic_0001>
module attributes {stable_mosaic.version = 11 : i64} {
  func.func @_vmem_gather_kernel(%arg0: i32, %arg1: memref<8xi32, #tpu.memory_space<smem>>, %arg2: memref<11x128xf32, #tpu.memory_space<vmem>>, %arg3: memref<8x128xf32, #tpu.memory_space<vmem>>) attributes {dimension_semantics = [#tpu.dimension_semantics<parallel>], iteration_bounds = array<i64: 1>, scalar_prefetch = 1 : i64, scratch_operands = 0 : i64, tpu.core_type = #tpu.core_type<tc>, window_params = [{pipeline_mode = #tpu.pipeline_mode<synchronous>, transform_indices = @transform_0, window_bounds = array<i64: 11, 128>}, {transform_indices = @transform_1, window_bounds = array<i64: 8, 128>}]} {
    %c8_i32 = arith.constant 8 : i32
    %0 = arith.muli %arg0, %c8_i32 : i32
    %c0_i32 = arith.constant 0 : i32
    %1 = arith.addi %0, %c0_i32 : i32
    %2 = arith.index_cast %1 : i32 to index
    %3 = memref.load %arg1[%2] : memref<8xi32, #tpu.memory_space<smem>>
    %4 = arith.index_cast %3 : i32 to index
    %c0 = arith.constant 0 : index
    %5 = vector.load %arg2[%4, %c0] : memref<11x128xf32, #tpu.memory_space<vmem>>, vector<1x128xf32>
    %c0_0 = arith.constant 0 : index
    %c0_1 = arith.constant 0 : index
    %6 = vector.load %arg3[%c0_0, %c0_1] : memref<8x128xf32, #tpu.memory_space<vmem>>, vector<1x128xf32>
    tpu.vector_store %arg3[%c0_0, %c0_1], %5 {strides = array<i32>} : memref<8x128xf32, #tpu.memory_space<vmem>>, vector<1x128xf32>,
    %c1_i32 = arith.constant 1 : i32
    %7 = arith.addi %0, %c1_i32 : i32
    %8 = arith.index_cast %7 : i32 to index
    %9 = memref.load %arg1[%8] : memref<8xi32, #tpu.memory_space<smem>>
    %10 = arith.index_cast %9 : i32 to index
    %c0_2 = arith.constant 0 : index
    %11 = vector.load %arg2[%10, %c0_2] : memref<11x128xf32, #tpu.memory_space<vmem>>, vector<1x128xf32>
    %c1 = arith.constant 1 : index
    %c0_3 = arith.constant 0 : index
    %12 = vector.load %arg3[%c1, %c0_3] : memref<8x128xf32, #tpu.memory_space<vmem>>, vector<1x128xf32>
    tpu.vector_store %arg3[%c1, %c0_3], %11 {strides = array<i32>} : memref<8x128xf32, #tpu.memory_space<vmem>>, vector<1x128xf32>,
    %c2_i32 = arith.constant 2 : i32
    %13 = arith.addi %0, %c2_i32 : i32
    %14 = arith.index_cast %13 : i32 to index
    %15 = memref.load %arg1[%14] : memref<8xi32, #tpu.memory_space<smem>>
    %16 = arith.index_cast %15 : i32 to index
    %c0_4 = arith.constant 0 : index
    %17 = vector.load %arg2[%16, %c0_4] : memref<11x128xf32, #tpu.memory_space<vmem>>, vector<1x128xf32>
    %c2 = arith.constant 2 : index
    %c0_5 = arith.constant 0 : index
    %18 = vector.load %arg3[%c2, %c0_5] : memref<8x128xf32, #tpu.memory_space<vmem>>, vector<1x128xf32>
    tpu.vector_store %arg3[%c2, %c0_5], %17 {strides = array<i32>} : memref<8x128xf32, #tpu.memory_space<vmem>>, vector<1x128xf32>,
    %c3_i32 = arith.constant 3 : i32
    %19 = arith.addi %0, %c3_i32 : i32
    %20 = arith.index_cast %19 : i32 to index
    %21 = memref.load %arg1[%20] : memref<8xi32, #tpu.memory_space<smem>>
    %22 = arith.index_cast %21 : i32 to index
    %c0_6 = arith.constant 0 : index
    %23 = vector.load %arg2[%22, %c0_6] : memref<11x128xf32, #tpu.memory_space<vmem>>, vector<1x128xf32>
    %c3 = arith.constant 3 : index
    %c0_7 = arith.constant 0 : index
    %24 = vector.load %arg3[%c3, %c0_7] : memref<8x128xf32, #tpu.memory_space<vmem>>, vector<1x128xf32>
    tpu.vector_store %arg3[%c3, %c0_7], %23 {strides = array<i32>} : memref<8x128xf32, #tpu.memory_space<vmem>>, vector<1x128xf32>,
    %c4_i32 = arith.constant 4 : i32
    %25 = arith.addi %0, %c4_i32 : i32
    %26 = arith.index_cast %25 : i32 to index
    %27 = memref.load %arg1[%26] : memref<8xi32, #tpu.memory_space<smem>>
    %28 = arith.index_cast %27 : i32 to index
    %c0_8 = arith.constant 0 : index
    %29 = vector.load %arg2[%28, %c0_8] : memref<11x128xf32, #tpu.memory_space<vmem>>, vector<1x128xf32>
    %c4 = arith.constant 4 : index
    %c0_9 = arith.constant 0 : index
    %30 = vector.load %arg3[%c4, %c0_9] : memref<8x128xf32, #tpu.memory_space<vmem>>, vector<1x128xf32>
    tpu.vector_store %arg3[%c4, %c0_9], %29 {strides = array<i32>} : memref<8x128xf32, #tpu.memory_space<vmem>>, vector<1x128xf32>,
    %c5_i32 = arith.constant 5 : i32
    %31 = arith.addi %0, %c5_i32 : i32
    %32 = arith.index_cast %31 : i32 to index
    %33 = memref.load %arg1[%32] : memref<8xi32, #tpu.memory_space<smem>>
    %34 = arith.index_cast %33 : i32 to index
    %c0_10 = arith.constant 0 : index
    %35 = vector.load %arg2[%34, %c0_10] : memref<11x128xf32, #tpu.memory_space<vmem>>, vector<1x128xf32>
    %c5 = arith.constant 5 : index
    %c0_11 = arith.constant 0 : index
    %36 = vector.load %arg3[%c5, %c0_11] : memref<8x128xf32, #tpu.memory_space<vmem>>, vector<1x128xf32>
    tpu.vector_store %arg3[%c5, %c0_11], %35 {strides = array<i32>} : memref<8x128xf32, #tpu.memory_space<vmem>>, vector<1x128xf32>,
    %c6_i32 = arith.constant 6 : i32
    %37 = arith.addi %0, %c6_i32 : i32
    %38 = arith.index_cast %37 : i32 to index
    %39 = memref.load %arg1[%38] : memref<8xi32, #tpu.memory_space<smem>>
    %40 = arith.index_cast %39 : i32 to index
    %c0_12 = arith.constant 0 : index
    %41 = vector.load %arg2[%40, %c0_12] : memref<11x128xf32, #tpu.memory_space<vmem>>, vector<1x128xf32>
    %c6 = arith.constant 6 : index
    %c0_13 = arith.constant 0 : index
    %42 = vector.load %arg3[%c6, %c0_13] : memref<8x128xf32, #tpu.memory_space<vmem>>, vector<1x128xf32>
    tpu.vector_store %arg3[%c6, %c0_13], %41 {strides = array<i32>} : memref<8x128xf32, #tpu.memory_space<vmem>>, vector<1x128xf32>,
    %c7_i32 = arith.constant 7 : i32
    %43 = arith.addi %0, %c7_i32 : i32
    %44 = arith.index_cast %43 : i32 to index
    %45 = memref.load %arg1[%44] : memref<8xi32, #tpu.memory_space<smem>>
    %46 = arith.index_cast %45 : i32 to index
    %c0_14 = arith.constant 0 : index
    %47 = vector.load %arg2[%46, %c0_14] : memref<11x128xf32, #tpu.memory_space<vmem>>, vector<1x128xf32>
    %c7 = arith.constant 7 : index
    %c0_15 = arith.constant 0 : index
    %48 = vector.load %arg3[%c7, %c0_15] : memref<8x128xf32, #tpu.memory_space<vmem>>, vector<1x128xf32>
    tpu.vector_store %arg3[%c7, %c0_15], %47 {strides = array<i32>} : memref<8x128xf32, #tpu.memory_space<vmem>>, vector<1x128xf32>,
    return
  }
  func.func @transform_0(%arg0: i32, %arg1: memref<8xi32, #tpu.memory_space<smem>>) -> (i32, i32) {
    %c0_i32 = arith.constant 0 : i32
    %c0_i32_0 = arith.constant 0 : i32
    %c0_i32_1 = arith.constant 0 : i32
    return %c0_i32, %c0_i32_0 : i32, i32
  }
  func.func @transform_1(%arg0: i32, %arg1: memref<8xi32, #tpu.memory_space<smem>>) -> (i32, i32) {
    %c0_i32 = arith.constant 0 : i32
    %c0_i32_0 = arith.constant 0 : i32
    return %arg0, %c0_i32 : i32, i32
  }
}

</mosaic_0001>

<llo_original>
// kernel: _padded_lookup.1
$region0: #{_padded_lookup.1}
  #allocation0 [shape = 'u32[]', space=smem, size = 0x4, offset = 0x4, fixed_abs, tag = 'smem constant byte address 0x4 - core index']
  #allocation1 [shape = 'u32[144,128]{1,0:T(1,128)}', space=vmem, size = 0x12000, scoped, tag = 'internal scratch']
  #allocation2 [shape = 's32[1]{0}', space=sflag, size = 0x4, scoped, tag = 'scoped memory for _padded_lookup.1']
  #allocation3 [shape = 'u8[512]{0}', space=smem, size = 0x200, scoped, tag = 'prefetched SMEM operand 0']
  %s0 = inlined_call_operand.vmem [shape: s32[8], index: 0, kind: input, shape index: {}]
  %s1 = inlined_call_operand.hbm [shape: f32[11,128], index: 1, kind: input, shape index: {}]
  %s2 = inlined_call_operand.hbm [shape: f32[8,128], index: 2, kind: output, shape index: {}]
  %s3 = sld [smem:[#allocation0]]
  $region18: #{_padded_lookup.1} parent=0
    _
  %s5 = ssub.s32 1, %s3
  %s6 = scalar_select 0, %s5, %s3
  %s7 = sshll.u32 %s0, 4
  %s8 = int_to_ptr.vmem [resolvable:$true] %s7
  %10 = dma.vmem_to_smem %s8, 16, [#allocation3], [#allocation2]
  %11 = dma.done [#allocation2], 16
  %12 = sfence
  $region1: #{_padded_lookup.1} parent=0
    #allocation4 [shape = 'u8[8192]{0}', space=vmem, size = 0x2000, scoped, tag = 'input window, operand 1, single buffered']
    #allocation5 [shape = 's32[1]{0}', space=sflag, size = 0x4, scoped, tag = 'scoped memory for _padded_lookup.1']
    #allocation6 [shape = 's32[1]{0}', space=sflag, size = 0x4, scoped, tag = 'scoped memory for _padded_lookup.1']
    #allocation7 [shape = 'u8[4096]{0}', space=vmem, size = 0x1000, scoped, tag = 'output window, operand 0, single buffered']
    %13 = vsyncpa [#allocation5], 0
    %14 = vsyncpa [#allocation6], 0
    // Predicated region
    $region2: #{_padded_lookup.1} parent=1 // pred_check
      _
    $region3: #{_padded_lookup.1} parent=1 // pred_check_branch
      %16 = sbr.rel (0) target = $region5
    $region4: #{_padded_lookup.1} parent=1 // pred_region
      %s18 = ssub.s32 256, 256
      %19 = vsyncadd [#allocation5], %s18
      %s20 = sshll.u32 [#allocation4], 4
      %s21 = int_to_ptr.vmem [resolvable:$true] %s20
      %26 = dma.hbm_to_vmem [thread:$0]  %s1, 256, %s21, [#allocation5], 128, 128, 8
    $region5: #{_padded_lookup.1} parent=1 // pred_fallthru
      _
    // Predicated region
    $region6: #{_padded_lookup.1} parent=1 // pred_check
      _
    $region7: #{_padded_lookup.1} parent=1 // pred_check_branch
      %28 = sbr.rel (0) target = $region9
    $region8: #{_padded_lookup.1} parent=1 // pred_region
      %29 = dma.done [#allocation5], 256
    $region9: #{_padded_lookup.1} parent=1 // pred_fallthru
      _
    %s30 = smul.u32 0, 8
    %s31 = sld [smem:[#allocation3 + %s30]]
    %s32 = scalar_lea.vmem [#allocation4], %s31
    %v33 = vld [vmem:[%s32] sm:$0x1]
    %34 = vst [vmem:[#allocation7] sm:$0x1] %v33
    %s35 = sadd.s32 %s30, 1
    %s36 = sld [smem:[#allocation3 + %s35]]
    %s37 = scalar_lea.vmem [#allocation4], %s36
    %v38 = vld [vmem:[%s37] sm:$0x1]
    %39 = vst [vmem:[#allocation7 + $0x1] sm:$0x1] %v38
    %s40 = sadd.s32 %s30, 2
    %s41 = sld [smem:[#allocation3 + %s40]]
    %s42 = scalar_lea.vmem [#allocation4], %s41
    %v43 = vld [vmem:[%s42] sm:$0x1]
    %44 = vst [vmem:[#allocation7 + $0x2] sm:$0x1] %v43
    %s45 = sadd.s32 %s30, 3
    %s46 = sld [smem:[#allocation3 + %s45]]
    %s47 = scalar_lea.vmem [#allocation4], %s46
    %v48 = vld [vmem:[%s47] sm:$0x1]
    %49 = vst [vmem:[#allocation7 + $0x3] sm:$0x1] %v48
    %s50 = sadd.s32 %s30, 4
    %s51 = sld [smem:[#allocation3 + %s50]]
    %s52 = scalar_lea.vmem [#allocation4], %s51
    %v53 = vld [vmem:[%s52] sm:$0x1]
    %54 = vst [vmem:[#allocation7 + $0x4] sm:$0x1] %v53
    %s55 = sadd.s32 %s30, 5
    %s56 = sld [smem:[#allocation3 + %s55]]
    %s57 = scalar_lea.vmem [#allocation4], %s56
    %v58 = vld [vmem:[%s57] sm:$0x1]
    %59 = vst [vmem:[#allocation7 + $0x5] sm:$0x1] %v58
    %s60 = sadd.s32 %s30, 6
    %s61 = sld [smem:[#allocation3 + %s60]]
    %s62 = scalar_lea.vmem [#allocation4], %s61
    %v63 = vld [vmem:[%s62] sm:$0x1]
    %64 = vst [vmem:[#allocation7 + $0x6] sm:$0x1] %v63
    %s65 = sadd.s32 %s30, 7
    %s66 = sld [smem:[#allocation3 + %s65]]
    %s67 = scalar_lea.vmem [#allocation4], %s66
    %v68 = vld [vmem:[%s67] sm:$0x1]
    %69 = vst [vmem:[#allocation7 + $0x7] sm:$0x1] %v68
    // Predicated region
    $region10: #{_padded_lookup.1} parent=1 // pred_check
      _
    $region11: #{_padded_lookup.1} parent=1 // pred_check_branch
      %71 = sbr.rel (0) target = $region13
    $region12: #{_padded_lookup.1} parent=1 // pred_region
      %s73 = ssub.s32 128, 128
      %74 = vsyncadd [#allocation6], %s73
      %s76 = sshll.u32 [#allocation7], 4
      %s77 = int_to_ptr.vmem [resolvable:$true] %s76
      %79 = dma.vmem_to_hbm [thread:$0]  %s77, 128, %s2, [#allocation6]
    $region13: #{_padded_lookup.1} parent=1 // pred_fallthru
      _
    // Predicated region
    $region14: #{_padded_lookup.1} parent=1 // pred_check
      _
    $region15: #{_padded_lookup.1} parent=1 // pred_check_branch
      %81 = sbr.rel (0) target = $region17
    $region16: #{_padded_lookup.1} parent=1 // pred_region
      %82 = dma.done [#allocation6], 128
    $region17: #{_padded_lookup.1} parent=1 // pred_fallthru
      _
    %83 = vsyncpa [#allocation5], 1
    %84 = vsyncpa [#allocation6], 1

</llo_original>
